<compile_context>
chip_gen: v7x
topology: tpu7x:2x2x1
jax: 0.10.0
libtpu: 0.0.40
codegen_flags: <defaults>
</compile_context>

<pallas_src>
import jax
import jax.numpy as jnp
from jax.experimental import pallas as pl
from jax.experimental.pallas import tpu as pltpu


def _round_up(n, m):
    return ((n + m - 1) // m) * m


def _ppo_mlp_kernel(x_ref, w1_ref, b1_ref, w2_ref, b2_ref, w3_ref, b3_ref,
                    out_ref):
    # x_ref: (obs_dim, bm) bf16 ; wN_ref: (out, in) bf16 ; bN_ref: (out, 1) f32
    # Layer 1: Linear + Tanh   (policy_net[0], policy_net[1])
    h = jnp.dot(w1_ref[...], x_ref[...], preferred_element_type=jnp.float32)
    h = jnp.tanh(h + b1_ref[...])
    # Layer 2: Linear + Tanh   (policy_net[2], policy_net[3])
    h = jnp.dot(w2_ref[...], h.astype(jnp.bfloat16),
                preferred_element_type=jnp.float32)
    h = jnp.tanh(h + b2_ref[...])
    # action_net: Linear (logits, no activation).  Output (n_actions, bm) is
    # lane-dense (bm on lanes), so stores are unmasked full-width vst.
    y = jnp.dot(w3_ref[...], h.astype(jnp.bfloat16),
                preferred_element_type=jnp.float32)
    out_ref[...] = (y + b3_ref[...]).astype(out_ref.dtype)


def sb3_ppo_forward(x, params, *, block_m=8192):
    """Pallas implementation of SB3TorchWrapper.forward (mode='PPO').

    params: torch-native layout — wN of shape (out, in), bN of shape (out,).
    Returns logits of shape (batch, n_actions) in float32.
    """
    w1, b1, w2, b2, w3, b3 = params
    batch, obs_dim = x.shape
    n_actions = w3.shape[0]

    # Single fused wrapper pass over x: transpose + bf16 cast.  Batch lands on
    # the lane axis; no separate cast pass, no pad pass.
    x_t = x.T.astype(jnp.bfloat16)                      # (obs_dim, batch)
    w1_bf, w2_bf, w3_bf = (w.astype(jnp.bfloat16) for w in (w1, w2, w3))
    b1_c, b2_c, b3_c = (b.astype(jnp.float32).reshape(-1, 1)
                        for b in (b1, b2, b3))

    # Batch tile on the lane axis: multiple of 128 (lane width), capped at
    # block_m.  Tiny batches use a single full-extent tile.  Keep >= 2 grid
    # tiles when possible so both v7x TensorCores get work.
    if batch <= 128:
        bm = batch
    else:
        bm = min(block_m, _round_up(batch, 128))
        if pl.cdiv(batch, bm) < 2:
            bm = _round_up(pl.cdiv(batch, 2), 128)
    grid = (pl.cdiv(batch, bm),)

    def resident(a):
        # Grid-invariant block index -> DMA'd once, stays resident in VMEM.
        return pl.BlockSpec(a.shape, lambda i: (0, 0))

    out_t = pl.pallas_call(
        _ppo_mlp_kernel,
        out_shape=jax.ShapeDtypeStruct((n_actions, batch), jnp.float32),
        grid=grid,
        in_specs=[
            pl.BlockSpec((obs_dim, bm), lambda i: (0, i)),   # streamed x^T
            resident(w1_bf), resident(b1_c),
            resident(w2_bf), resident(b2_c),
            resident(w3_bf), resident(b3_c),
        ],
        out_specs=pl.BlockSpec((n_actions, bm), lambda i: (0, i)),
        compiler_params=pltpu.CompilerParams(
            # "parallel" batch axis: megacore sharding on v7x.
            dimension_semantics=("parallel",),
            # Sized for block_m up to ~16K (x/out double-buffered + f32
            # intermediates ~= 12 MiB); safely below v7x's scoped ceiling.
            vmem_limit_bytes=32 * 1024 * 1024,
        ),
    )(x_t, w1_bf, b1_c, w2_bf, b2_c, w3_bf, b3_c)

    return out_t.T                                      # (batch, n_actions)


def init_params(key, obs_dim, hidden, n_actions):
    """Deterministic synthetic init mimicking torch.nn.Linear defaults
    (uniform +/- 1/sqrt(fan_in)); torch-native shapes: W (out, in), b (out,)."""
    def linear(k, fan_in, fan_out):
        kw, kb = jax.random.split(k)
        bound = float(fan_in) ** -0.5
        w = jax.random.uniform(kw, (fan_out, fan_in), jnp.float32, -bound, bound)
        b = jax.random.uniform(kb, (fan_out,), jnp.float32, -bound, bound)
        return w, b

    k1, k2, k3 = jax.random.split(key, 3)
    w1, b1 = linear(k1, obs_dim, hidden)
    w2, b2 = linear(k2, hidden, hidden)
    w3, b3 = linear(k3, hidden, n_actions)
    return (w1, b1, w2, b2, w3, b3)


def _reference_f32(x, params):
    w1, b1, w2, b2, w3, b3 = params
    h = jnp.tanh(x @ w1.T + b1)
    h = jnp.tanh(h @ w2.T + b2)
    return h @ w3.T + b3


def _reference_bf16(x, params):
    # Mirrors the kernel's precision: bf16 matmul operands, f32 accumulation,
    # f32 elementwise (bias add / tanh).
    w1, b1, w2, b2, w3, b3 = params

    def dot_t(a, w):
        return jnp.dot(a.astype(jnp.bfloat16), w.astype(jnp.bfloat16).T,
                       preferred_element_type=jnp.float32)

    h = jnp.tanh(dot_t(x, w1) + b1)
    h = jnp.tanh(dot_t(h, w2) + b2)
    return dot_t(h, w3) + b3


if __name__ == "__main__":
    key = jax.random.PRNGKey(0)
    k_x, k_p, k_big = jax.random.split(key, 3)

    batch, obs_dim, hidden, n_actions = 2, 32, 64, 8
    x = jax.random.normal(k_x, (batch, obs_dim), jnp.float32)
    params = init_params(k_p, obs_dim, hidden, n_actions)

    # Small batch: single full-extent tile (bm == batch).
    out = jax.block_until_ready(sb3_ppo_forward(x, params))
    assert out.shape == (batch, n_actions)
    assert jnp.allclose(out, _reference_bf16(x, params), atol=2e-3, rtol=2e-3)
    assert jnp.allclose(out, _reference_f32(x, params), atol=5e-2, rtol=5e-2)

    # Larger, non-tile-aligned batch: exercises the multi-tile grid (bm=640,
    # 2 grid steps), the partial last block (dropped OOB writes) and the
    # transpose-back path.
    big_batch = 1040
    x_big = jax.random.normal(k_big, (big_batch, obs_dim), jnp.float32)
    out_big = jax.block_until_ready(sb3_ppo_forward(x_big, params))
    assert out_big.shape == (big_batch, n_actions)
    assert jnp.allclose(out_big, _reference_bf16(x_big, params),
                        atol=2e-3, rtol=2e-3)
    assert bool(jnp.all(jnp.isfinite(out_big)))

    # TODO(synk): the mode='DQN' branch (q_net: Linear+ReLU stack) is
    # structurally identical; only the PPO path is instantiated here.
    print("KERNEL_OK")
</pallas_src>

<mosaic_0001>
module attributes {stable_mosaic.version = 11 : i64} {
  func.func @_ppo_mlp_kernel(%arg0: i32, %arg1: memref<32x2xbf16, #tpu.memory_space<vmem>>, %arg2: memref<64x32xbf16, #tpu.memory_space<vmem>>, %arg3: memref<64x1xf32, #tpu.memory_space<vmem>>, %arg4: memref<64x64xbf16, #tpu.memory_space<vmem>>, %arg5: memref<64x1xf32, #tpu.memory_space<vmem>>, %arg6: memref<8x64xbf16, #tpu.memory_space<vmem>>, %arg7: memref<8x1xf32, #tpu.memory_space<vmem>>, %arg8: memref<8x2xf32, #tpu.memory_space<vmem>>) attributes {dimension_semantics = [#tpu.dimension_semantics<parallel>], iteration_bounds = array<i64: 1>, scalar_prefetch = 0 : i64, scratch_operands = 0 : i64, tpu.core_type = #tpu.core_type<tc>, window_params = [{transform_indices = @transform_0, window_bounds = array<i64: 32, 2>}, {pipeline_mode = #tpu.pipeline_mode<synchronous>, transform_indices = @transform_1, window_bounds = array<i64: 64, 32>}, {pipeline_mode = #tpu.pipeline_mode<synchronous>, transform_indices = @transform_2, window_bounds = array<i64: 64, 1>}, {pipeline_mode = #tpu.pipeline_mode<synchronous>, transform_indices = @transform_3, window_bounds = array<i64: 64, 64>}, {pipeline_mode = #tpu.pipeline_mode<synchronous>, transform_indices = @transform_4, window_bounds = array<i64: 64, 1>}, {pipeline_mode = #tpu.pipeline_mode<synchronous>, transform_indices = @transform_5, window_bounds = array<i64: 8, 64>}, {pipeline_mode = #tpu.pipeline_mode<synchronous>, transform_indices = @transform_6, window_bounds = array<i64: 8, 1>}, {transform_indices = @transform_7, window_bounds = array<i64: 8, 2>}]} {
    %c0 = arith.constant 0 : index
    %c0_0 = arith.constant 0 : index
    %0 = vector.load %arg2[%c0, %c0_0] : memref<64x32xbf16, #tpu.memory_space<vmem>>, vector<64x32xbf16>
    %c0_1 = arith.constant 0 : index
    %c0_2 = arith.constant 0 : index
    %1 = vector.load %arg1[%c0_1, %c0_2] : memref<32x2xbf16, #tpu.memory_space<vmem>>, vector<32x2xbf16>
    %cst = arith.constant dense<0.000000e+00> : vector<64x2xf32>
    %2 = tpu.matmul %0, %1, %cst {dimension_numbers = #tpu.dot_dimension_numbers<[1], [0], [0], [1], [0, 0, 1, 1], [], []>} : vector<64x32xbf16>, vector<32x2xbf16>, vector<64x2xf32> -> vector<64x2xf32>
    %c0_3 = arith.constant 0 : index
    %c0_4 = arith.constant 0 : index
    %3 = vector.load %arg3[%c0_3, %c0_4] : memref<64x1xf32, #tpu.memory_space<vmem>>, vector<64x1xf32>
    %4 = vector.broadcast %3 : vector<64x1xf32> to vector<64x2xf32>
    %5 = arith.addf %2, %4 : vector<64x2xf32>
    %6 = math.tanh %5 : vector<64x2xf32>
    %c0_5 = arith.constant 0 : index
    %c0_6 = arith.constant 0 : index
    %7 = vector.load %arg4[%c0_5, %c0_6] : memref<64x64xbf16, #tpu.memory_space<vmem>>, vector<64x64xbf16>
    %8 = arith.truncf %6 : vector<64x2xf32> to vector<64x2xbf16>
    %cst_7 = arith.constant dense<0.000000e+00> : vector<64x2xf32>
    %9 = tpu.matmul %7, %8, %cst_7 {dimension_numbers = #tpu.dot_dimension_numbers<[1], [0], [0], [1], [0, 0, 1, 1], [], []>} : vector<64x64xbf16>, vector<64x2xbf16>, vector<64x2xf32> -> vector<64x2xf32>
    %c0_8 = arith.constant 0 : index
    %c0_9 = arith.constant 0 : index
    %10 = vector.load %arg5[%c0_8, %c0_9] : memref<64x1xf32, #tpu.memory_space<vmem>>, vector<64x1xf32>
    %11 = vector.broadcast %10 : vector<64x1xf32> to vector<64x2xf32>
    %12 = arith.addf %9, %11 : vector<64x2xf32>
    %13 = math.tanh %12 : vector<64x2xf32>
    %c0_10 = arith.constant 0 : index
    %c0_11 = arith.constant 0 : index
    %14 = vector.load %arg6[%c0_10, %c0_11] : memref<8x64xbf16, #tpu.memory_space<vmem>>, vector<8x64xbf16>
    %15 = arith.truncf %13 : vector<64x2xf32> to vector<64x2xbf16>
    %cst_12 = arith.constant dense<0.000000e+00> : vector<8x2xf32>
    %16 = tpu.matmul %14, %15, %cst_12 {dimension_numbers = #tpu.dot_dimension_numbers<[1], [0], [0], [1], [0, 0, 1, 1], [], []>} : vector<8x64xbf16>, vector<64x2xbf16>, vector<8x2xf32> -> vector<8x2xf32>
    %c0_13 = arith.constant 0 : index
    %c0_14 = arith.constant 0 : index
    %17 = vector.load %arg7[%c0_13, %c0_14] : memref<8x1xf32, #tpu.memory_space<vmem>>, vector<8x1xf32>
    %18 = vector.broadcast %17 : vector<8x1xf32> to vector<8x2xf32>
    %19 = arith.addf %16, %18 : vector<8x2xf32>
    %c0_15 = arith.constant 0 : index
    %c0_16 = arith.constant 0 : index
    %20 = vector.load %arg8[%c0_15, %c0_16] : memref<8x2xf32, #tpu.memory_space<vmem>>, vector<8x2xf32>
    tpu.vector_store %arg8[%c0_15, %c0_16], %19 {strides = array<i32>} : memref<8x2xf32, #tpu.memory_space<vmem>>, vector<8x2xf32>,
    return
  }
  func.func @transform_0(%arg0: i32) -> (i32, i32) {
    %c0_i32 = arith.constant 0 : i32
    %c0_i32_0 = arith.constant 0 : i32
    return %c0_i32, %arg0 : i32, i32
  }
  func.func @transform_1(%arg0: i32) -> (i32, i32) {
    %c0_i32 = arith.constant 0 : i32
    %c0_i32_0 = arith.constant 0 : i32
    %c0_i32_1 = arith.constant 0 : i32
    return %c0_i32, %c0_i32_0 : i32, i32
  }
  func.func @transform_2(%arg0: i32) -> (i32, i32) {
    %c0_i32 = arith.constant 0 : i32
    %c0_i32_0 = arith.constant 0 : i32
    %c0_i32_1 = arith.constant 0 : i32
    return %c0_i32, %c0_i32_0 : i32, i32
  }
  func.func @transform_3(%arg0: i32) -> (i32, i32) {
    %c0_i32 = arith.constant 0 : i32
    %c0_i32_0 = arith.constant 0 : i32
    %c0_i32_1 = arith.constant 0 : i32
    return %c0_i32, %c0_i32_0 : i32, i32
  }
  func.func @transform_4(%arg0: i32) -> (i32, i32) {
    %c0_i32 = arith.constant 0 : i32
    %c0_i32_0 = arith.constant 0 : i32
    %c0_i32_1 = arith.constant 0 : i32
    return %c0_i32, %c0_i32_0 : i32, i32
  }
  func.func @transform_5(%arg0: i32) -> (i32, i32) {
    %c0_i32 = arith.constant 0 : i32
    %c0_i32_0 = arith.constant 0 : i32
    %c0_i32_1 = arith.constant 0 : i32
    return %c0_i32, %c0_i32_0 : i32, i32
  }
  func.func @transform_6(%arg0: i32) -> (i32, i32) {
    %c0_i32 = arith.constant 0 : i32
    %c0_i32_0 = arith.constant 0 : i32
    %c0_i32_1 = arith.constant 0 : i32
    return %c0_i32, %c0_i32_0 : i32, i32
  }
  func.func @transform_7(%arg0: i32) -> (i32, i32) {
    %c0_i32 = arith.constant 0 : i32
    %c0_i32_0 = arith.constant 0 : i32
    return %c0_i32, %arg0 : i32, i32
  }
}

</mosaic_0001>

<llo_original>
// kernel: tpu_custom_call.1
$region0: #{tpu_custom_call.1}
  #allocation0 [shape = 'u32[]', space=smem, size = 0x4, offset = 0x4, fixed_abs, tag = 'smem constant byte address 0x4 - core index']
  #allocation1 [shape = 'u32[144,128]{1,0:T(1,128)}', space=vmem, size = 0x12000, scoped, tag = 'internal scratch']
  %s0 = inlined_call_operand.vmem [shape: bf16[32,2], index: 0, kind: input, shape index: {}]
  %s1 = inlined_call_operand.vmem [shape: bf16[64,32], index: 1, kind: input, shape index: {}]
  %s2 = inlined_call_operand.vmem [shape: f32[64,1], index: 2, kind: input, shape index: {}]
  %s3 = inlined_call_operand.vmem [shape: bf16[64,64], index: 3, kind: input, shape index: {}]
  %s4 = inlined_call_operand.vmem [shape: f32[64,1], index: 4, kind: input, shape index: {}]
  %s5 = inlined_call_operand.vmem [shape: bf16[8,64], index: 5, kind: input, shape index: {}]
  %s6 = inlined_call_operand.vmem [shape: f32[8,1], index: 6, kind: input, shape index: {}]
  %s7 = inlined_call_operand.vmem [shape: f32[8,2], index: 7, kind: output, shape index: {}]
  %s8 = sld [smem:[#allocation0]]
  $region38: #{tpu_custom_call.1} parent=0
    _
  %s10 = ssub.s32 1, %s8
  %s11 = scalar_select 0, %s10, %s8
  // Predicated region
  $region2: #{tpu_custom_call.1} parent=0 // pred_check
    _
  $region3: #{tpu_custom_call.1} parent=0 // pred_check_branch
    %13 = sbr.rel (0) target = $region5
  $region4: #{tpu_custom_call.1} parent=0 // pred_region
    _
  $region5: #{tpu_custom_call.1} parent=0 // pred_fallthru
    _
  // Predicated region
  $region6: #{tpu_custom_call.1} parent=0 // pred_check
    _
  $region7: #{tpu_custom_call.1} parent=0 // pred_check_branch
    %15 = sbr.rel (0) target = $region9
  $region8: #{tpu_custom_call.1} parent=0 // pred_region
    _
  $region9: #{tpu_custom_call.1} parent=0 // pred_fallthru
    _
  // Predicated region
  $region10: #{tpu_custom_call.1} parent=0 // pred_check
    _
  $region11: #{tpu_custom_call.1} parent=0 // pred_check_branch
    %17 = sbr.rel (0) target = $region13
  $region12: #{tpu_custom_call.1} parent=0 // pred_region
    _
  $region13: #{tpu_custom_call.1} parent=0 // pred_fallthru
    _
  // Predicated region
  $region14: #{tpu_custom_call.1} parent=0 // pred_check
    _
  $region15: #{tpu_custom_call.1} parent=0 // pred_check_branch
    %19 = sbr.rel (0) target = $region17
  $region16: #{tpu_custom_call.1} parent=0 // pred_region
    _
  $region17: #{tpu_custom_call.1} parent=0 // pred_fallthru
    _
  // Predicated region
  $region18: #{tpu_custom_call.1} parent=0 // pred_check
    _
  $region19: #{tpu_custom_call.1} parent=0 // pred_check_branch
    %21 = sbr.rel (0) target = $region21
  $region20: #{tpu_custom_call.1} parent=0 // pred_region
    _
  $region21: #{tpu_custom_call.1} parent=0 // pred_fallthru
    _
  // Predicated region
  $region22: #{tpu_custom_call.1} parent=0 // pred_check
    _
  $region23: #{tpu_custom_call.1} parent=0 // pred_check_branch
    %23 = sbr.rel (0) target = $region25
  $region24: #{tpu_custom_call.1} parent=0 // pred_region
    _
  $region25: #{tpu_custom_call.1} parent=0 // pred_fallthru
    _
  // Predicated region
  $region26: #{tpu_custom_call.1} parent=0 // pred_check
    _
  $region27: #{tpu_custom_call.1} parent=0 // pred_check_branch
    %25 = sbr.rel (0) target = $region29
  $region28: #{tpu_custom_call.1} parent=0 // pred_region
    _
  $region29: #{tpu_custom_call.1} parent=0 // pred_fallthru
    _
  %v27 = vld [vmem:[%s1] sm:$0xf]
  %v28 = vld [vmem:[%s1 + $0x4] sm:$0xf]
  %v29 = vld [vmem:[%s1 + $0x8] sm:$0xf]
  %v30 = vld [vmem:[%s1 + $0xc] sm:$0xf]
  %v31 = vld [vmem:[%s1 + $0x10] sm:$0xf]
  %v32 = vld [vmem:[%s1 + $0x14] sm:$0xf]
  %v33 = vld [vmem:[%s1 + $0x18] sm:$0xf]
  %v34 = vld [vmem:[%s1 + $0x1c] sm:$0xf]
  %v35 = vld [vmem:[%s0] sm:$0xf]
  %v36 = vld [vmem:[%s0 + $0x4] sm:$0xf]
  %v37 = vld [vmem:[%s0 + $0x8] sm:$0xf]
  %v38 = vld [vmem:[%s0 + $0xc] sm:$0xf]
  %v39 = vld [vmem:[%s2] sm:$0xff]
  %v40 = vld [vmem:[%s2 + $0x8] sm:$0xff]
  %v41 = vld [vmem:[%s2 + $0x10] sm:$0xff]
  %v42 = vld [vmem:[%s2 + $0x18] sm:$0xff]
  %v43 = vld [vmem:[%s2 + $0x20] sm:$0xff]
  %v44 = vld [vmem:[%s2 + $0x28] sm:$0xff]
  %v45 = vld [vmem:[%s2 + $0x30] sm:$0xff]
  %v46 = vld [vmem:[%s2 + $0x38] sm:$0xff]
  %48 = vset.pattern.permute.xlu0 0
  %49 = vperm.xlu0 %48, %v39
  %v50 = vpop.permute.xlu0 %49
  %53 = vset.pattern.permute.xlu0 0
  %54 = vperm.xlu0 %53, %v40
  %v55 = vpop.permute.xlu0 %54
  %58 = vset.pattern.permute.xlu0 0
  %59 = vperm.xlu0 %58, %v41
  %v60 = vpop.permute.xlu0 %59
  %63 = vset.pattern.permute.xlu0 0
  %64 = vperm.xlu0 %63, %v42
  %v65 = vpop.permute.xlu0 %64
  %68 = vset.pattern.permute.xlu0 0
  %69 = vperm.xlu0 %68, %v43
  %v70 = vpop.permute.xlu0 %69
  %73 = vset.pattern.permute.xlu0 0
  %74 = vperm.xlu0 %73, %v44
  %v75 = vpop.permute.xlu0 %74
  %78 = vset.pattern.permute.xlu0 0
  %79 = vperm.xlu0 %78, %v45
  %v80 = vpop.permute.xlu0 %79
  %83 = vset.pattern.permute.xlu0 0
  %84 = vperm.xlu0 %83, %v46
  %v85 = vpop.permute.xlu0 %84
  %v95 = vunpack.c.l.b16 %v27
  %v96 = vunpack.c.l.b16 %v28
  %v97 = vunpack.c.l.b16 %v29
  %v98 = vunpack.c.l.b16 %v30
  %v99 = vunpack.c.l.b16 %v31
  %v100 = vunpack.c.l.b16 %v32
  %v101 = vunpack.c.l.b16 %v33
  %v102 = vunpack.c.l.b16 %v34
  %v103 = vpack.c.b16 %v96, %v95
  %v104 = vpack.c.b16 %v98, %v97
  %v105 = vpack.c.b16 %v100, %v99
  %v106 = vpack.c.b16 %v102, %v101
  %v111 = vunpack.c.l.b16 %v35
  %v112 = vunpack.c.l.b16 %v36
  %v113 = vunpack.c.l.b16 %v37
  %v114 = vunpack.c.l.b16 %v38
  %v115 = vpack.c.b16 %v112, %v111
  %v116 = vpack.c.b16 %v114, %v113
  %vm119 = vcmask 261120
  %v121 = vsel %vm119, %v103, 0
  %v124 = vsel %vm119, %v104, 0
  %v127 = vsel %vm119, %v105, 0
  %v130 = vsel %vm119, %v106, 0
  %132 = vmatprep.subr.bf16.mxu0 0
  %133 = vmatpush1.bf16.msra.mxu0 %v115
  %134 = vmatprep.subr.bf16.mxu0 0
  %135 = vmatpush1.bf16.msra.mxu0 %v116
  %136 = vmatprep.subr.bf16.mxu0 0
  %137 = vmatpush1.bf16.msra.mxu0 0
  %138 = vmatprep.subr.bf16.mxu0 0
  %139 = vmatpush1.bf16.msra.mxu0 0
  %140 = vmatprep.subr.bf16.mxu0 0
  %141 = vmatpush1.bf16.msra.mxu0 0
  %142 = vmatprep.subr.bf16.mxu0 0
  %143 = vmatpush1.bf16.msra.mxu0 0
  %144 = vmatprep.subr.bf16.mxu0 0
  %145 = vmatpush1.bf16.msra.mxu0 0
  %146 = vmatprep.subr.bf16.mxu0 0
  %147 = vmatpush1.bf16.msra.mxu0 0
  %148 = vmatprep.subr.bf16.mxu0 0
  %149 = vmatpush1.bf16.msra.mxu0 0
  %150 = vmatprep.subr.bf16.mxu0 0
  %151 = vmatpush1.bf16.msra.mxu0 0
  %152 = vmatprep.subr.bf16.mxu0 0
  %153 = vmatpush1.bf16.msra.mxu0 0
  %154 = vmatprep.subr.bf16.mxu0 0
  %155 = vmatpush1.bf16.msra.mxu0 0
  %156 = vmatprep.subr.bf16.mxu0 0
  %157 = vmatpush1.bf16.msra.mxu0 0
  %158 = vmatprep.subr.bf16.mxu0 0
  %159 = vmatpush1.bf16.msra.mxu0 0
  %160 = vmatprep.subr.bf16.mxu0 0
  %161 = vmatpush1.bf16.msra.mxu0 0
  %162 = vmatprep.subr.bf16.mxu0 0
  %163 = vmatpush1.bf16.msra.mxu0 0
  %164 = vmatprep.mubr.bf16.mxu0 0
  %165 = vmatmul.mubr.bf16.gmra.mrb[0].mxu0 %v121
  %v166 = vpop.f32.mrb[0].mxu0
  %v167 = vadd.f32 %v50, %v166
  %v168 = vpop.f32.mrb[0].mxu0
  %v169 = vpop.f32.mrb[0].mxu0
  %v170 = vadd.f32 %v55, %v169
  %v171 = vpop.f32.mrb[0].mxu0
  %172 = vmatprep.mubr.bf16.mxu0 0
  %173 = vmatmul.mubr.bf16.gmra.mrb[0].mxu0 %v124
  %v174 = vpop.f32.mrb[0].mxu0
  %v175 = vadd.f32 %v60, %v174
  %v176 = vpop.f32.mrb[0].mxu0
  %v177 = vpop.f32.mrb[0].mxu0
  %v178 = vadd.f32 %v65, %v177
  %v179 = vpop.f32.mrb[0].mxu0
  %180 = vmatprep.mubr.bf16.mxu0 0
  %181 = vmatmul.mubr.bf16.gmra.mrb[0].mxu0 %v127
  %v182 = vpop.f32.mrb[0].mxu0
  %v183 = vadd.f32 %v70, %v182
  %v184 = vpop.f32.mrb[0].mxu0
  %v185 = vpop.f32.mrb[0].mxu0
  %v186 = vadd.f32 %v75, %v185
  %v187 = vpop.f32.mrb[0].mxu0
  %188 = vmatprep.mubr.bf16.mxu0 0
  %189 = vmatmul.mubr.bf16.gmra.mrb[0].mxu0 %v130
  %v190 = vpop.f32.mrb[0].mxu0
  %v191 = vadd.f32 %v80, %v190
  %v192 = vpop.f32.mrb[0].mxu0
  %v193 = vpop.f32.mrb[0].mxu0
  %v194 = vadd.f32 %v85, %v193
  %v195 = vpop.f32.mrb[0].mxu0
  %196 = vdwg.mxu0
  %v197 = vtanh.pop %v167
  %v198 = vtanh.pop %v170
  %v199 = vtanh.pop %v175
  %v200 = vtanh.pop %v178
  %v201 = vtanh.pop %v183
  %v202 = vtanh.pop %v186
  %v203 = vtanh.pop %v191
  %v204 = vtanh.pop %v194
  %v205 = vld [vmem:[%s3] sm:$0xf]
  %v206 = vld [vmem:[%s3 + $0x4] sm:$0xf]
  %v207 = vld [vmem:[%s3 + $0x8] sm:$0xf]
  %v208 = vld [vmem:[%s3 + $0xc] sm:$0xf]
  %v209 = vld [vmem:[%s3 + $0x10] sm:$0xf]
  %v210 = vld [vmem:[%s3 + $0x14] sm:$0xf]
  %v211 = vld [vmem:[%s3 + $0x18] sm:$0xf]
  %v212 = vld [vmem:[%s3 + $0x1c] sm:$0xf]
  %v213 = vpack.c.bf16 %v198, %v197
  %v214 = vpack.c.bf16 %v200, %v199
  %v215 = vpack.c.bf16 %v202, %v201
  %v216 = vpack.c.bf16 %v204, %v203
  %v217 = vld [vmem:[%s4] sm:$0xff]
  %v218 = vld [vmem:[%s4 + $0x8] sm:$0xff]
  %v219 = vld [vmem:[%s4 + $0x10] sm:$0xff]
  %v220 = vld [vmem:[%s4 + $0x18] sm:$0xff]
  %v221 = vld [vmem:[%s4 + $0x20] sm:$0xff]
  %v222 = vld [vmem:[%s4 + $0x28] sm:$0xff]
  %v223 = vld [vmem:[%s4 + $0x30] sm:$0xff]
  %v224 = vld [vmem:[%s4 + $0x38] sm:$0xff]
  %226 = vset.pattern.permute.xlu0 0
  %227 = vperm.xlu0 %226, %v217
  %v228 = vpop.permute.xlu0 %227
  %231 = vset.pattern.permute.xlu0 0
  %232 = vperm.xlu0 %231, %v218
  %v233 = vpop.permute.xlu0 %232
  %236 = vset.pattern.permute.xlu0 0
  %237 = vperm.xlu0 %236, %v219
  %v238 = vpop.permute.xlu0 %237
  %241 = vset.pattern.permute.xlu0 0
  %242 = vperm.xlu0 %241, %v220
  %v243 = vpop.permute.xlu0 %242
  %246 = vset.pattern.permute.xlu0 0
  %247 = vperm.xlu0 %246, %v221
  %v248 = vpop.permute.xlu0 %247
  %251 = vset.pattern.permute.xlu0 0
  %252 = vperm.xlu0 %251, %v222
  %v253 = vpop.permute.xlu0 %252
  %256 = vset.pattern.permute.xlu0 0
  %257 = vperm.xlu0 %256, %v223
  %v258 = vpop.permute.xlu0 %257
  %261 = vset.pattern.permute.xlu0 0
  %262 = vperm.xlu0 %261, %v224
  %v263 = vpop.permute.xlu0 %262
  %v273 = vunpack.c.l.b16 %v205
  %v274 = vunpack.c.l.b16 %v206
  %v275 = vunpack.c.l.b16 %v207
  %v276 = vunpack.c.l.b16 %v208
  %v277 = vunpack.c.l.b16 %v209
  %v278 = vunpack.c.l.b16 %v210
  %v279 = vunpack.c.l.b16 %v211
  %v280 = vunpack.c.l.b16 %v212
  %v281 = vpack.c.b16 %v274, %v273
  %v282 = vpack.c.b16 %v276, %v275
  %v283 = vpack.c.b16 %v278, %v277
  %v284 = vpack.c.b16 %v280, %v279
  %vm285 = vcmask 523264
  %v287 = vsel %vm285, %v281, 0
  %v290 = vsel %vm285, %v282, 0
  %v293 = vsel %vm285, %v283, 0
  %v296 = vsel %vm285, %v284, 0
  %298 = vmatprep.subr.bf16.mxu0 0
  %299 = vmatpush1.bf16.msra.mxu0 %v213
  %300 = vmatprep.subr.bf16.mxu0 0
  %301 = vmatpush1.bf16.msra.mxu0 %v214
  %302 = vmatprep.subr.bf16.mxu0 0
  %303 = vmatpush1.bf16.msra.mxu0 %v215
  %304 = vmatprep.subr.bf16.mxu0 0
  %305 = vmatpush1.bf16.msra.mxu0 %v216
  %306 = vmatprep.subr.bf16.mxu0 0
  %307 = vmatpush1.bf16.msra.mxu0 0
  %308 = vmatprep.subr.bf16.mxu0 0
  %309 = vmatpush1.bf16.msra.mxu0 0
  %310 = vmatprep.subr.bf16.mxu0 0
  %311 = vmatpush1.bf16.msra.mxu0 0
  %312 = vmatprep.subr.bf16.mxu0 0
  %313 = vmatpush1.bf16.msra.mxu0 0
  %314 = vmatprep.subr.bf16.mxu0 0
  %315 = vmatpush1.bf16.msra.mxu0 0
  %316 = vmatprep.subr.bf16.mxu0 0
  %317 = vmatpush1.bf16.msra.mxu0 0
  %318 = vmatprep.subr.bf16.mxu0 0
  %319 = vmatpush1.bf16.msra.mxu0 0
  %320 = vmatprep.subr.bf16.mxu0 0
  %321 = vmatpush1.bf16.msra.mxu0 0
  %322 = vmatprep.subr.bf16.mxu0 0
  %323 = vmatpush1.bf16.msra.mxu0 0
  %324 = vmatprep.subr.bf16.mxu0 0
  %325 = vmatpush1.bf16.msra.mxu0 0
  %326 = vmatprep.subr.bf16.mxu0 0
  %327 = vmatpush1.bf16.msra.mxu0 0
  %328 = vmatprep.subr.bf16.mxu0 0
  %329 = vmatpush1.bf16.msra.mxu0 0
  %330 = vmatprep.mubr.bf16.mxu0 0
  %331 = vmatmul.mubr.bf16.gmra.mrb[0].mxu0 %v287
  %v332 = vpop.f32.mrb[0].mxu0
  %v333 = vadd.f32 %v228, %v332
  %v334 = vpop.f32.mrb[0].mxu0
  %v335 = vpop.f32.mrb[0].mxu0
  %v336 = vadd.f32 %v233, %v335
  %v337 = vpop.f32.mrb[0].mxu0
  %338 = vmatprep.mubr.bf16.mxu0 0
  %339 = vmatmul.mubr.bf16.gmra.mrb[0].mxu0 %v290
  %v340 = vpop.f32.mrb[0].mxu0
  %v341 = vadd.f32 %v238, %v340
  %v342 = vpop.f32.mrb[0].mxu0
  %v343 = vpop.f32.mrb[0].mxu0
  %v344 = vadd.f32 %v243, %v343
  %v345 = vpop.f32.mrb[0].mxu0
  %346 = vmatprep.mubr.bf16.mxu0 0
  %347 = vmatmul.mubr.bf16.gmra.mrb[0].mxu0 %v293
  %v348 = vpop.f32.mrb[0].mxu0
  %v349 = vadd.f32 %v248, %v348
  %v350 = vpop.f32.mrb[0].mxu0
  %v351 = vpop.f32.mrb[0].mxu0
  %v352 = vadd.f32 %v253, %v351
  %v353 = vpop.f32.mrb[0].mxu0
  %354 = vmatprep.mubr.bf16.mxu0 0
  %355 = vmatmul.mubr.bf16.gmra.mrb[0].mxu0 %v296
  %v356 = vpop.f32.mrb[0].mxu0
  %v357 = vadd.f32 %v258, %v356
  %v358 = vpop.f32.mrb[0].mxu0
  %v359 = vpop.f32.mrb[0].mxu0
  %v360 = vadd.f32 %v263, %v359
  %v361 = vpop.f32.mrb[0].mxu0
  %362 = vdwg.mxu0
  %v363 = vtanh.pop %v333
  %v364 = vtanh.pop %v336
  %v365 = vtanh.pop %v341
  %v366 = vtanh.pop %v344
  %v367 = vtanh.pop %v349
  %v368 = vtanh.pop %v352
  %v369 = vtanh.pop %v357
  %v370 = vtanh.pop %v360
  %v371 = vld [vmem:[%s5] sm:$0xf]
  %v372 = vpack.c.bf16 %v364, %v363
  %v373 = vpack.c.bf16 %v366, %v365
  %v374 = vpack.c.bf16 %v368, %v367
  %v375 = vpack.c.bf16 %v370, %v369
  %v376 = vld [vmem:[%s6] sm:$0xff]
  %378 = vset.pattern.permute.xlu0 0
  %379 = vperm.xlu0 %378, %v376
  %v380 = vpop.permute.xlu0 %379
  %v383 = vsel %vm285, %v371, 0
  %385 = vmatprep.subr.bf16.mxu0 0
  %386 = vmatpush1.bf16.msra.mxu0 %v372
  %387 = vmatprep.subr.bf16.mxu0 0
  %388 = vmatpush1.bf16.msra.mxu0 %v373
  %389 = vmatprep.subr.bf16.mxu0 0
  %390 = vmatpush1.bf16.msra.mxu0 %v374
  %391 = vmatprep.subr.bf16.mxu0 0
  %392 = vmatpush1.bf16.msra.mxu0 %v375
  %393 = vmatprep.subr.bf16.mxu0 0
  %394 = vmatpush1.bf16.msra.mxu0 0
  %395 = vmatprep.subr.bf16.mxu0 0
  %396 = vmatpush1.bf16.msra.mxu0 0
  %397 = vmatprep.subr.bf16.mxu0 0
  %398 = vmatpush1.bf16.msra.mxu0 0
  %399 = vmatprep.subr.bf16.mxu0 0
  %400 = vmatpush1.bf16.msra.mxu0 0
  %401 = vmatprep.subr.bf16.mxu0 0
  %402 = vmatpush1.bf16.msra.mxu0 0
  %403 = vmatprep.subr.bf16.mxu0 0
  %404 = vmatpush1.bf16.msra.mxu0 0
  %405 = vmatprep.subr.bf16.mxu0 0
  %406 = vmatpush1.bf16.msra.mxu0 0
  %407 = vmatprep.subr.bf16.mxu0 0
  %408 = vmatpush1.bf16.msra.mxu0 0
  %409 = vmatprep.subr.bf16.mxu0 0
  %410 = vmatpush1.bf16.msra.mxu0 0
  %411 = vmatprep.subr.bf16.mxu0 0
  %412 = vmatpush1.bf16.msra.mxu0 0
  %413 = vmatprep.subr.bf16.mxu0 0
  %414 = vmatpush1.bf16.msra.mxu0 0
  %415 = vmatprep.subr.bf16.mxu0 0
  %416 = vmatpush1.bf16.msra.mxu0 0
  %417 = vmatprep.mubr.bf16.mxu0 0
  %418 = vmatmul.mubr.bf16.gmra.mrb[0].mxu0 %v383
  %v419 = vpop.f32.mrb[0].mxu0
  %v420 = vadd.f32 %v380, %v419
  %v421 = vpop.f32.mrb[0].mxu0
  %v422 = vpop.f32.mrb[0].mxu0
  %v423 = vpop.f32.mrb[0].mxu0
  %424 = vdwg.mxu0
  %vm425 = vcmask 15360
  %426 = vst.msk [vmem:[%s7] sm:$0xff] %vm425, %v420
  // Predicated region
  $region30: #{tpu_custom_call.1} parent=0 // pred_check
    _
  $region31: #{tpu_custom_call.1} parent=0 // pred_check_branch
    %428 = sbr.rel (0) target = $region33
  $region32: #{tpu_custom_call.1} parent=0 // pred_region
    _
  $region33: #{tpu_custom_call.1} parent=0 // pred_fallthru
    _
  // Predicated region
  $region34: #{tpu_custom_call.1} parent=0 // pred_check
    _
  $region35: #{tpu_custom_call.1} parent=0 // pred_check_branch
    %430 = sbr.rel (0) target = $region37
  $region36: #{tpu_custom_call.1} parent=0 // pred_region
    _
  $region37: #{tpu_custom_call.1} parent=0 // pred_fallthru
    _

</llo_original>
